<compile_context>
chip_gen: v6e
topology: v6e:2x2x1
jax: 0.10.0
libtpu: 0.0.40
codegen_flags: <defaults>
</compile_context>

<pallas_src>
import math

import jax
import jax.numpy as jnp
from jax.experimental import pallas as pl
from jax.experimental.pallas import tpu as pltpu

NROWS = 16  # conv1's 2 output channels zero-padded to one bf16 sublane tile


def _round_up(x, m):
    return (x + m - 1) // m * m


def _cdiv(a, b):
    return -(-a // b)


# ---------------------------------------------------------------------------
# OutConv forward (fused Pallas kernel)
# ---------------------------------------------------------------------------
def out_conv_pallas(x_nchw, params):
    w1 = params["conv"]["w"]      # (2, Cin, 3, 3)
    b1 = params["conv"]["b"]      # (2,)
    w2 = params["conv2"]["w"]     # (1, 2, 1, 1)
    b2 = params["conv2"]["b"]     # (1,)

    B, Cin, H, W = x_nchw.shape
    Hp, Wp = H + 2, W + 2                       # spatially padded size (padding=1)
    Npix = B * Hp * Wp                          # outputs are computed for every padded
                                                # position; invalid ring sliced off below.

    # ---- tiling -------------------------------------------------------------
    # TM: lane-dim tile of flattened pixels.  Multiple of 128 (lane-dense stores and
    # 128-aligned DMA windows), capped at 2048, sized so the grid has ~8+ steps.
    TM = min(2048, max(128, _round_up(_cdiv(Npix, 8), 128)))
    nt = _cdiv(Npix, TM)
    HALO = 2 * Wp + 2                           # largest tap offset (dy = dx = 2)
    HALO_PAD = _round_up(HALO, 128)             # keep the DMA window lane-aligned
    TMH = TM + HALO_PAD
    CTOT = nt * TM + HALO_PAD                   # exactly covers the last tile's window

    # ---- operands -----------------------------------------------------------
    # Channels-first, spatially padded, pixels flattened into the fast lane dim.
    # Cast to bf16 FIRST so every later pad/transpose moves half the bytes.
    x_bf = x_nchw.astype(jnp.bfloat16)
    xp = jnp.pad(x_bf, ((0, 0), (0, 0), (1, 1), (1, 1)))            # (B, Cin, Hp, Wp)
    xcf = jnp.transpose(xp, (1, 0, 2, 3)).reshape(Cin, Npix)        # (Cin, Npix)
    LPAD = Wp + 1                                # tap (dy, dx) of pixel p reads column
                                                 # p + dy*Wp + dx   (always in-bounds)
    xflat = jnp.pad(xcf, ((0, 0), (LPAD, CTOT - LPAD - Npix)))      # (Cin, CTOT) bf16

    # conv1 weight per tap: (2, Cin) zero-padded to (NROWS, Cin), stacked over 9 taps.
    w1s = jnp.transpose(w1, (2, 3, 0, 1)).reshape(9, 2, Cin)
    w1s = jnp.pad(w1s, ((0, 0), (0, NROWS - 2), (0, 0))).astype(jnp.bfloat16)

    # Consolidated epilogue scalars: [b1_0, b1_1, w2_0, w2_1, b2, 0, 0, 0] in SMEM.
    epi = jnp.concatenate([
        b1.reshape(2), w2.reshape(2), b2.reshape(1), jnp.zeros((3,), b2.dtype)
    ]).astype(jnp.float32)

    # ---- kernel -------------------------------------------------------------
    def kernel(x_hbm, w1_ref, epi_ref, o_ref, slab, sem):
        t = pl.program_id(0)
        slot = t % 2                              # 2 slots: no WAR hazard across steps
        start = pl.multiple_of(t * TM, 128)

        # Halo'd strip of the flattened input for this tile: (Cin, TM + HALO_PAD).
        cp = pltpu.make_async_copy(
            x_hbm.at[:, pl.ds(start, TMH)], slab.at[slot], sem.at[slot])
        cp.start()
        # Scalar reads before the DMA wait (keeps SMEM forwarding intact).
        b1_0 = epi_ref[0]
        b1_1 = epi_ref[1]
        w2_0 = epi_ref[2]
        w2_1 = epi_ref[3]
        b2_s = epi_ref[4]
        cp.wait()

        blk = slab.at[slot]
        acc = jnp.zeros((NROWS, TM), jnp.float32)
        # Nine taps = nine lane-shifted slices of the strip; bf16 x bf16 -> f32 on MXU.
        for dy in range(3):
            for dx in range(3):
                off = dy * Wp + dx                               # static offset
                xs = blk[:, off:off + TM]                        # (Cin, TM) bf16
                acc = acc + jnp.dot(w1_ref[dy * 3 + dx], xs,
                                    preferred_element_type=jnp.float32)

        # Epilogue (f32 on the VPU, v5e-safe): conv1 bias + ReLU on the two real
        # channel rows, then the fused 1x1 conv (2 -> 1) + bias, stored lane-dense.
        y0 = jnp.maximum(acc[0:1, :] + b1_0, 0.0)
        y1 = jnp.maximum(acc[1:2, :] + b1_1, 0.0)
        o_ref[0] = (w2_0 * y0 + w2_1 * y1 + b2_s).astype(o_ref.dtype)

    out = pl.pallas_call(
        kernel,
        out_shape=jax.ShapeDtypeStruct((nt, 1, TM), jnp.float32),
        grid_spec=pltpu.PrefetchScalarGridSpec(
            num_scalar_prefetch=0,
            grid=(nt,),
            in_specs=[
                pl.BlockSpec(memory_space=pl.ANY),                       # x stays in HBM
                pl.BlockSpec((9, NROWS, Cin), lambda t: (0, 0, 0)),       # W1 resident
                pl.BlockSpec(memory_space=pltpu.MemorySpace.SMEM),        # epilogue scalars
            ],
            out_specs=pl.BlockSpec((1, 1, TM), lambda t: (t, 0, 0)),
            scratch_shapes=[
                pltpu.VMEM((2, Cin, TMH), jnp.bfloat16),                  # halo'd strips
                pltpu.SemaphoreType.DMA((2,)),
            ],
        ),
        compiler_params=pltpu.CompilerParams(
            dimension_semantics=("parallel",),
        ),
    )(xflat, w1s, epi)

    # Rows past Npix and the padded ring hold garbage by construction; slice them off.
    flat = out.reshape(nt * TM)[:Npix].reshape(B, Hp, Wp)
    return flat[:, 1:H + 1, 1:W + 1][:, None, :, :]                       # (B, 1, H, W)


# ---------------------------------------------------------------------------
# Pure-JAX reference (f32, highest precision) for a correctness check
# ---------------------------------------------------------------------------
def out_conv_ref(x, params):
    y = jax.lax.conv_general_dilated(
        x, params["conv"]["w"], window_strides=(1, 1), padding=((1, 1), (1, 1)),
        dimension_numbers=("NCHW", "OIHW", "NCHW"),
        precision=jax.lax.Precision.HIGHEST)
    y = jnp.maximum(y + params["conv"]["b"].reshape(1, -1, 1, 1), 0.0)
    z = jax.lax.conv_general_dilated(
        y, params["conv2"]["w"], window_strides=(1, 1), padding="VALID",
        dimension_numbers=("NCHW", "OIHW", "NCHW"),
        precision=jax.lax.Precision.HIGHEST)
    return z + params["conv2"]["b"].reshape(1, -1, 1, 1)


# ---------------------------------------------------------------------------
# Deterministic parameter init (shapes follow the PyTorch __init__)
# ---------------------------------------------------------------------------
def make_params(key, in_channels):
    k1, k2, k3, k4 = jax.random.split(key, 4)
    s1 = 1.0 / math.sqrt(in_channels * 9)
    s2 = 1.0 / math.sqrt(2.0)
    return {
        "conv": {"w": s1 * jax.random.normal(k1, (2, in_channels, 3, 3), jnp.float32),
                 "b": s1 * jax.random.normal(k2, (2,), jnp.float32)},
        "conv2": {"w": s2 * jax.random.normal(k3, (1, 2, 1, 1), jnp.float32),
                  "b": s2 * jax.random.normal(k4, (1,), jnp.float32)},
    }


if __name__ == "__main__":
    key = jax.random.PRNGKey(0)
    pkey, xkey = jax.random.split(key)
    # OutConv(64, n_classes) is how the parent UNet uses this head.
    B, C, H, W = 2, 64, 16, 16
    params = make_params(pkey, in_channels=C)
    x = jax.random.normal(xkey, (B, C, H, W), jnp.float32)

    fwd = jax.jit(out_conv_pallas)
    logits = jax.block_until_ready(fwd(x, params))
    assert logits.shape == (B, 1, H, W), logits.shape

    ref = jax.block_until_ready(out_conv_ref(x, params))
    err = float(jnp.max(jnp.abs(logits - ref)))
    assert err < 1e-1, f"max abs error vs reference: {err}"
    print("KERNEL_OK")
</pallas_src>

<mosaic_0001>
module attributes {stable_mosaic.version = 11 : i64} {
  func.func @kernel(%arg0: i32, %arg1: memref<64x896xbf16, #tpu.memory_space<any>>, %arg2: memref<9x16x64xbf16, #tpu.memory_space<vmem>>, %arg3: memref<8xf32, #tpu.memory_space<smem>>, %arg4: memref<1x1x128xf32, #tpu.memory_space<vmem>>, %arg5: memref<2x64x256xbf16, #tpu.memory_space<vmem>>, %arg6: memref<2x!tpu.dma_semaphore, #tpu.memory_space<semaphore_mem>>) attributes {dimension_semantics = [#tpu.dimension_semantics<parallel>], iteration_bounds = array<i64: 6>, scalar_prefetch = 0 : i64, scratch_operands = 2 : i64, tpu.core_type = #tpu.core_type<tc>, window_params = [{}, {pipeline_mode = #tpu.pipeline_mode<synchronous>, transform_indices = @transform_1, window_bounds = array<i64: 9, 16, 64>}, {transform_indices = @transform_2, window_bounds = array<i64: 8>}, {transform_indices = @transform_3, window_bounds = array<i64: 1, 1, 128>}]} {
    %c2_i32 = arith.constant 2 : i32
    %c0_i32 = arith.constant 0 : i32
    %0 = arith.cmpi eq, %c2_i32, %c0_i32 : i32
    %c1_i32 = arith.constant 1 : i32
    %1 = arith.select %0, %c1_i32, %c2_i32 : i32
    %2 = arith.remsi %arg0, %1 : i32
    %c0_i32_0 = arith.constant 0 : i32
    %3 = arith.cmpi ne, %2, %c0_i32_0 : i32
    %c0_i32_1 = arith.constant 0 : i32
    %4 = arith.cmpi slt, %2, %c0_i32_1 : i32
    %c0_i32_2 = arith.constant 0 : i32
    %5 = arith.cmpi slt, %1, %c0_i32_2 : i32
    %6 = arith.xori %4, %5 : i1
    %7 = arith.andi %6, %3 : i1
    %8 = arith.addi %2, %1 : i32
    %9 = arith.select %7, %8, %2 : i32
    %c128_i32 = arith.constant 128 : i32
    %10 = arith.muli %arg0, %c128_i32 : i32
    %11 = tpu.assume_multiple %10, 128 : i32
    %c0_i32_3 = arith.constant 0 : i32
    %12 = tpu.memref_slice %arg1[%c0_i32_3, %11] : memref<64x896xbf16, #tpu.memory_space<any>> -> memref<64x256xbf16, #tpu.memory_space<any>>
    %c0_i32_4 = arith.constant 0 : i32
    %c0_i32_5 = arith.constant 0 : i32
    %13 = tpu.memref_slice %arg5[%9, %c0_i32_4, %c0_i32_5] : memref<2x64x256xbf16, #tpu.memory_space<vmem>> -> memref<1x64x256xbf16, #tpu.memory_space<vmem>>
    %14 = tpu.memref_squeeze %13 : memref<1x64x256xbf16, #tpu.memory_space<vmem>> -> memref<64x256xbf16, #tpu.memory_space<vmem>>
    %15 = tpu.memref_slice %arg6[%9] : memref<2x!tpu.dma_semaphore, #tpu.memory_space<semaphore_mem>> -> memref<1x!tpu.dma_semaphore, #tpu.memory_space<semaphore_mem>>
    %16 = tpu.memref_squeeze %15 : memref<1x!tpu.dma_semaphore, #tpu.memory_space<semaphore_mem>> -> memref<!tpu.dma_semaphore, #tpu.memory_space<semaphore_mem>>
    tpu.enqueue_dma source(%12 : memref<64x256xbf16, #tpu.memory_space<any>>) target(%14 : memref<64x256xbf16, #tpu.memory_space<vmem>>) target_semaphore(%16 : memref<!tpu.dma_semaphore, #tpu.memory_space<semaphore_mem>>)
    %c0 = arith.constant 0 : index
    %17 = memref.load %arg3[%c0] : memref<8xf32, #tpu.memory_space<smem>>
    %c1 = arith.constant 1 : index
    %18 = memref.load %arg3[%c1] : memref<8xf32, #tpu.memory_space<smem>>
    %c2 = arith.constant 2 : index
    %19 = memref.load %arg3[%c2] : memref<8xf32, #tpu.memory_space<smem>>
    %c3 = arith.constant 3 : index
    %20 = memref.load %arg3[%c3] : memref<8xf32, #tpu.memory_space<smem>>
    %c4 = arith.constant 4 : index
    %21 = memref.load %arg3[%c4] : memref<8xf32, #tpu.memory_space<smem>>
    %c0_i32_6 = arith.constant 0 : i32
    %22 = tpu.memref_slice %arg1[%c0_i32_6, %11] : memref<64x896xbf16, #tpu.memory_space<any>> -> memref<64x256xbf16, #tpu.memory_space<any>>
    %c0_i32_7 = arith.constant 0 : i32
    %c0_i32_8 = arith.constant 0 : i32
    %23 = tpu.memref_slice %arg5[%9, %c0_i32_7, %c0_i32_8] : memref<2x64x256xbf16, #tpu.memory_space<vmem>> -> memref<1x64x256xbf16, #tpu.memory_space<vmem>>
    %24 = tpu.memref_squeeze %23 : memref<1x64x256xbf16, #tpu.memory_space<vmem>> -> memref<64x256xbf16, #tpu.memory_space<vmem>>
    %25 = tpu.memref_slice %arg6[%9] : memref<2x!tpu.dma_semaphore, #tpu.memory_space<semaphore_mem>> -> memref<1x!tpu.dma_semaphore, #tpu.memory_space<semaphore_mem>>
    %26 = tpu.memref_squeeze %25 : memref<1x!tpu.dma_semaphore, #tpu.memory_space<semaphore_mem>> -> memref<!tpu.dma_semaphore, #tpu.memory_space<semaphore_mem>>
    tpu.wait_dma2 semaphore(%26 : memref<!tpu.dma_semaphore, #tpu.memory_space<semaphore_mem>>) src(%22 : memref<64x256xbf16, #tpu.memory_space<any>>) dst(%24 : memref<64x256xbf16, #tpu.memory_space<vmem>>)
    %cst = arith.constant 0.000000e+00 : f32
    %27 = vector.broadcast %cst : f32 to vector<16x128xf32>
    %c0_i32_9 = arith.constant 0 : i32
    %c0_i32_10 = arith.constant 0 : i32
    %28 = tpu.memref_slice %arg5[%9, %c0_i32_9, %c0_i32_10] : memref<2x64x256xbf16, #tpu.memory_space<vmem>> -> memref<1x64x256xbf16, #tpu.memory_space<vmem>>
    %29 = tpu.memref_squeeze %28 : memref<1x64x256xbf16, #tpu.memory_space<vmem>> -> memref<64x256xbf16, #tpu.memory_space<vmem>>
    %c0_11 = arith.constant 0 : index
    %c0_12 = arith.constant 0 : index
    %30 = vector.load %29[%c0_11, %c0_12] : memref<64x256xbf16, #tpu.memory_space<vmem>>, vector<64x128xbf16>
    %c0_13 = arith.constant 0 : index
    %c0_14 = arith.constant 0 : index
    %c0_15 = arith.constant 0 : index
    %31 = vector.load %arg2[%c0_13, %c0_14, %c0_15] : memref<9x16x64xbf16, #tpu.memory_space<vmem>>, vector<1x16x64xbf16>
    %32 = vector.shape_cast %31 : vector<1x16x64xbf16> to vector<16x64xbf16>
    %cst_16 = arith.constant dense<0.000000e+00> : vector<16x128xf32>
    %33 = tpu.matmul %32, %30, %cst_16 {dimension_numbers = #tpu.dot_dimension_numbers<[1], [0], [0], [1], [0, 0, 1, 1], [], []>} : vector<16x64xbf16>, vector<64x128xbf16>, vector<16x128xf32> -> vector<16x128xf32>
    %34 = arith.addf %27, %33 : vector<16x128xf32>
    %c0_i32_17 = arith.constant 0 : i32
    %c0_i32_18 = arith.constant 0 : i32
    %35 = tpu.memref_slice %arg5[%9, %c0_i32_17, %c0_i32_18] : memref<2x64x256xbf16, #tpu.memory_space<vmem>> -> memref<1x64x256xbf16, #tpu.memory_space<vmem>>
    %36 = tpu.memref_squeeze %35 : memref<1x64x256xbf16, #tpu.memory_space<vmem>> -> memref<64x256xbf16, #tpu.memory_space<vmem>>
    %c0_19 = arith.constant 0 : index
    %c1_20 = arith.constant 1 : index
    %37 = vector.load %36[%c0_19, %c1_20] : memref<64x256xbf16, #tpu.memory_space<vmem>>, vector<64x128xbf16>
    %c1_21 = arith.constant 1 : index
    %c0_22 = arith.constant 0 : index
    %c0_23 = arith.constant 0 : index
    %38 = vector.load %arg2[%c1_21, %c0_22, %c0_23] : memref<9x16x64xbf16, #tpu.memory_space<vmem>>, vector<1x16x64xbf16>
    %39 = vector.shape_cast %38 : vector<1x16x64xbf16> to vector<16x64xbf16>
    %cst_24 = arith.constant dense<0.000000e+00> : vector<16x128xf32>
    %40 = tpu.matmul %39, %37, %cst_24 {dimension_numbers = #tpu.dot_dimension_numbers<[1], [0], [0], [1], [0, 0, 1, 1], [], []>} : vector<16x64xbf16>, vector<64x128xbf16>, vector<16x128xf32> -> vector<16x128xf32>
    %41 = arith.addf %34, %40 : vector<16x128xf32>
    %c0_i32_25 = arith.constant 0 : i32
    %c0_i32_26 = arith.constant 0 : i32
    %42 = tpu.memref_slice %arg5[%9, %c0_i32_25, %c0_i32_26] : memref<2x64x256xbf16, #tpu.memory_space<vmem>> -> memref<1x64x256xbf16, #tpu.memory_space<vmem>>
    %43 = tpu.memref_squeeze %42 : memref<1x64x256xbf16, #tpu.memory_space<vmem>> -> memref<64x256xbf16, #tpu.memory_space<vmem>>
    %c0_27 = arith.constant 0 : index
    %c2_28 = arith.constant 2 : index
    %44 = vector.load %43[%c0_27, %c2_28] : memref<64x256xbf16, #tpu.memory_space<vmem>>, vector<64x128xbf16>
    %c2_29 = arith.constant 2 : index
    %c0_30 = arith.constant 0 : index
    %c0_31 = arith.constant 0 : index
    %45 = vector.load %arg2[%c2_29, %c0_30, %c0_31] : memref<9x16x64xbf16, #tpu.memory_space<vmem>>, vector<1x16x64xbf16>
    %46 = vector.shape_cast %45 : vector<1x16x64xbf16> to vector<16x64xbf16>
    %cst_32 = arith.constant dense<0.000000e+00> : vector<16x128xf32>
    %47 = tpu.matmul %46, %44, %cst_32 {dimension_numbers = #tpu.dot_dimension_numbers<[1], [0], [0], [1], [0, 0, 1, 1], [], []>} : vector<16x64xbf16>, vector<64x128xbf16>, vector<16x128xf32> -> vector<16x128xf32>
    %48 = arith.addf %41, %47 : vector<16x128xf32>
    %c0_i32_33 = arith.constant 0 : i32
    %c0_i32_34 = arith.constant 0 : i32
    %49 = tpu.memref_slice %arg5[%9, %c0_i32_33, %c0_i32_34] : memref<2x64x256xbf16, #tpu.memory_space<vmem>> -> memref<1x64x256xbf16, #tpu.memory_space<vmem>>
    %50 = tpu.memref_squeeze %49 : memref<1x64x256xbf16, #tpu.memory_space<vmem>> -> memref<64x256xbf16, #tpu.memory_space<vmem>>
    %c0_35 = arith.constant 0 : index
    %c18 = arith.constant 18 : index
    %51 = vector.load %50[%c0_35, %c18] : memref<64x256xbf16, #tpu.memory_space<vmem>>, vector<64x128xbf16>
    %c3_36 = arith.constant 3 : index
    %c0_37 = arith.constant 0 : index
    %c0_38 = arith.constant 0 : index
    %52 = vector.load %arg2[%c3_36, %c0_37, %c0_38] : memref<9x16x64xbf16, #tpu.memory_space<vmem>>, vector<1x16x64xbf16>
    %53 = vector.shape_cast %52 : vector<1x16x64xbf16> to vector<16x64xbf16>
    %cst_39 = arith.constant dense<0.000000e+00> : vector<16x128xf32>
    %54 = tpu.matmul %53, %51, %cst_39 {dimension_numbers = #tpu.dot_dimension_numbers<[1], [0], [0], [1], [0, 0, 1, 1], [], []>} : vector<16x64xbf16>, vector<64x128xbf16>, vector<16x128xf32> -> vector<16x128xf32>
    %55 = arith.addf %48, %54 : vector<16x128xf32>
    %c0_i32_40 = arith.constant 0 : i32
    %c0_i32_41 = arith.constant 0 : i32
    %56 = tpu.memref_slice %arg5[%9, %c0_i32_40, %c0_i32_41] : memref<2x64x256xbf16, #tpu.memory_space<vmem>> -> memref<1x64x256xbf16, #tpu.memory_space<vmem>>
    %57 = tpu.memref_squeeze %56 : memref<1x64x256xbf16, #tpu.memory_space<vmem>> -> memref<64x256xbf16, #tpu.memory_space<vmem>>
    %c0_42 = arith.constant 0 : index
    %c19 = arith.constant 19 : index
    %58 = vector.load %57[%c0_42, %c19] : memref<64x256xbf16, #tpu.memory_space<vmem>>, vector<64x128xbf16>
    %c4_43 = arith.constant 4 : index
    %c0_44 = arith.constant 0 : index
    %c0_45 = arith.constant 0 : index
    %59 = vector.load %arg2[%c4_43, %c0_44, %c0_45] : memref<9x16x64xbf16, #tpu.memory_space<vmem>>, vector<1x16x64xbf16>
    %60 = vector.shape_cast %59 : vector<1x16x64xbf16> to vector<16x64xbf16>
    %cst_46 = arith.constant dense<0.000000e+00> : vector<16x128xf32>
    %61 = tpu.matmul %60, %58, %cst_46 {dimension_numbers = #tpu.dot_dimension_numbers<[1], [0], [0], [1], [0, 0, 1, 1], [], []>} : vector<16x64xbf16>, vector<64x128xbf16>, vector<16x128xf32> -> vector<16x128xf32>
    %62 = arith.addf %55, %61 : vector<16x128xf32>
    %c0_i32_47 = arith.constant 0 : i32
    %c0_i32_48 = arith.constant 0 : i32
    %63 = tpu.memref_slice %arg5[%9, %c0_i32_47, %c0_i32_48] : memref<2x64x256xbf16, #tpu.memory_space<vmem>> -> memref<1x64x256xbf16, #tpu.memory_space<vmem>>
    %64 = tpu.memref_squeeze %63 : memref<1x64x256xbf16, #tpu.memory_space<vmem>> -> memref<64x256xbf16, #tpu.memory_space<vmem>>
    %c0_49 = arith.constant 0 : index
    %c20 = arith.constant 20 : index
    %65 = vector.load %64[%c0_49, %c20] : memref<64x256xbf16, #tpu.memory_space<vmem>>, vector<64x128xbf16>
    %c5 = arith.constant 5 : index
    %c0_50 = arith.constant 0 : index
    %c0_51 = arith.constant 0 : index
    %66 = vector.load %arg2[%c5, %c0_50, %c0_51] : memref<9x16x64xbf16, #tpu.memory_space<vmem>>, vector<1x16x64xbf16>
    %67 = vector.shape_cast %66 : vector<1x16x64xbf16> to vector<16x64xbf16>
    %cst_52 = arith.constant dense<0.000000e+00> : vector<16x128xf32>
    %68 = tpu.matmul %67, %65, %cst_52 {dimension_numbers = #tpu.dot_dimension_numbers<[1], [0], [0], [1], [0, 0, 1, 1], [], []>} : vector<16x64xbf16>, vector<64x128xbf16>, vector<16x128xf32> -> vector<16x128xf32>
    %69 = arith.addf %62, %68 : vector<16x128xf32>
    %c0_i32_53 = arith.constant 0 : i32
    %c0_i32_54 = arith.constant 0 : i32
    %70 = tpu.memref_slice %arg5[%9, %c0_i32_53, %c0_i32_54] : memref<2x64x256xbf16, #tpu.memory_space<vmem>> -> memref<1x64x256xbf16, #tpu.memory_space<vmem>>
    %71 = tpu.memref_squeeze %70 : memref<1x64x256xbf16, #tpu.memory_space<vmem>> -> memref<64x256xbf16, #tpu.memory_space<vmem>>
    %c0_55 = arith.constant 0 : index
    %c36 = arith.constant 36 : index
    %72 = vector.load %71[%c0_55, %c36] : memref<64x256xbf16, #tpu.memory_space<vmem>>, vector<64x128xbf16>
    %c6 = arith.constant 6 : index
    %c0_56 = arith.constant 0 : index
    %c0_57 = arith.constant 0 : index
    %73 = vector.load %arg2[%c6, %c0_56, %c0_57] : memref<9x16x64xbf16, #tpu.memory_space<vmem>>, vector<1x16x64xbf16>
    %74 = vector.shape_cast %73 : vector<1x16x64xbf16> to vector<16x64xbf16>
    %cst_58 = arith.constant dense<0.000000e+00> : vector<16x128xf32>
    %75 = tpu.matmul %74, %72, %cst_58 {dimension_numbers = #tpu.dot_dimension_numbers<[1], [0], [0], [1], [0, 0, 1, 1], [], []>} : vector<16x64xbf16>, vector<64x128xbf16>, vector<16x128xf32> -> vector<16x128xf32>
    %76 = arith.addf %69, %75 : vector<16x128xf32>
    %c0_i32_59 = arith.constant 0 : i32
    %c0_i32_60 = arith.constant 0 : i32
    %77 = tpu.memref_slice %arg5[%9, %c0_i32_59, %c0_i32_60] : memref<2x64x256xbf16, #tpu.memory_space<vmem>> -> memref<1x64x256xbf16, #tpu.memory_space<vmem>>
    %78 = tpu.memref_squeeze %77 : memref<1x64x256xbf16, #tpu.memory_space<vmem>> -> memref<64x256xbf16, #tpu.memory_space<vmem>>
    %c0_61 = arith.constant 0 : index
    %c37 = arith.constant 37 : index
    %79 = vector.load %78[%c0_61, %c37] : memref<64x256xbf16, #tpu.memory_space<vmem>>, vector<64x128xbf16>
    %c7 = arith.constant 7 : index
    %c0_62 = arith.constant 0 : index
    %c0_63 = arith.constant 0 : index
    %80 = vector.load %arg2[%c7, %c0_62, %c0_63] : memref<9x16x64xbf16, #tpu.memory_space<vmem>>, vector<1x16x64xbf16>
    %81 = vector.shape_cast %80 : vector<1x16x64xbf16> to vector<16x64xbf16>
    %cst_64 = arith.constant dense<0.000000e+00> : vector<16x128xf32>
    %82 = tpu.matmul %81, %79, %cst_64 {dimension_numbers = #tpu.dot_dimension_numbers<[1], [0], [0], [1], [0, 0, 1, 1], [], []>} : vector<16x64xbf16>, vector<64x128xbf16>, vector<16x128xf32> -> vector<16x128xf32>
    %83 = arith.addf %76, %82 : vector<16x128xf32>
    %c0_i32_65 = arith.constant 0 : i32
    %c0_i32_66 = arith.constant 0 : i32
    %84 = tpu.memref_slice %arg5[%9, %c0_i32_65, %c0_i32_66] : memref<2x64x256xbf16, #tpu.memory_space<vmem>> -> memref<1x64x256xbf16, #tpu.memory_space<vmem>>
    %85 = tpu.memref_squeeze %84 : memref<1x64x256xbf16, #tpu.memory_space<vmem>> -> memref<64x256xbf16, #tpu.memory_space<vmem>>
    %c0_67 = arith.constant 0 : index
    %c38 = arith.constant 38 : index
    %86 = vector.load %85[%c0_67, %c38] : memref<64x256xbf16, #tpu.memory_space<vmem>>, vector<64x128xbf16>
    %c8 = arith.constant 8 : index
    %c0_68 = arith.constant 0 : index
    %c0_69 = arith.constant 0 : index
    %87 = vector.load %arg2[%c8, %c0_68, %c0_69] : memref<9x16x64xbf16, #tpu.memory_space<vmem>>, vector<1x16x64xbf16>
    %88 = vector.shape_cast %87 : vector<1x16x64xbf16> to vector<16x64xbf16>
    %cst_70 = arith.constant dense<0.000000e+00> : vector<16x128xf32>
    %89 = tpu.matmul %88, %86, %cst_70 {dimension_numbers = #tpu.dot_dimension_numbers<[1], [0], [0], [1], [0, 0, 1, 1], [], []>} : vector<16x64xbf16>, vector<64x128xbf16>, vector<16x128xf32> -> vector<16x128xf32>
    %90 = arith.addf %83, %89 : vector<16x128xf32>
    %91 = vector.extract_strided_slice %90 {offsets = [0, 0], sizes = [1, 128], strides = [1, 1]} : vector<16x128xf32> to vector<1x128xf32>
    %92 = vector.broadcast %17 : f32 to vector<1x128xf32>
    %93 = arith.addf %91, %92 : vector<1x128xf32>
    %cst_71 = arith.constant 0.000000e+00 : f32
    %94 = vector.broadcast %cst_71 : f32 to vector<1x128xf32>
    %95 = arith.maximumf %93, %94 : vector<1x128xf32>
    %96 = vector.extract_strided_slice %90 {offsets = [1, 0], sizes = [1, 128], strides = [1, 1]} : vector<16x128xf32> to vector<1x128xf32>
    %97 = vector.broadcast %18 : f32 to vector<1x128xf32>
    %98 = arith.addf %96, %97 : vector<1x128xf32>
    %cst_72 = arith.constant 0.000000e+00 : f32
    %99 = vector.broadcast %cst_72 : f32 to vector<1x128xf32>
    %100 = arith.maximumf %98, %99 : vector<1x128xf32>
    %101 = vector.broadcast %19 : f32 to vector<1x128xf32>
    %102 = arith.mulf %101, %95 : vector<1x128xf32>
    %103 = vector.broadcast %20 : f32 to vector<1x128xf32>
    %104 = arith.mulf %103, %100 : vector<1x128xf32>
    %105 = arith.addf %102, %104 : vector<1x128xf32>
    %106 = vector.broadcast %21 : f32 to vector<1x128xf32>
    %107 = arith.addf %105, %106 : vector<1x128xf32>
    %c0_73 = arith.constant 0 : index
    %c0_74 = arith.constant 0 : index
    %c0_75 = arith.constant 0 : index
    %108 = vector.load %arg4[%c0_73, %c0_74, %c0_75] : memref<1x1x128xf32, #tpu.memory_space<vmem>>, vector<1x1x128xf32>
    %109 = vector.shape_cast %108 : vector<1x1x128xf32> to vector<1x128xf32>
    %110 = vector.shape_cast %107 : vector<1x128xf32> to vector<1x1x128xf32>
    tpu.vector_store %arg4[%c0_73, %c0_74, %c0_75], %110 {strides = array<i32>} : memref<1x1x128xf32, #tpu.memory_space<vmem>>, vector<1x1x128xf32>,
    return
  }
  func.func @transform_1(%arg0: i32) -> (i32, i32, i32) {
    %c0_i32 = arith.constant 0 : i32
    %c0_i32_0 = arith.constant 0 : i32
    %c0_i32_1 = arith.constant 0 : i32
    %c0_i32_2 = arith.constant 0 : i32
    return %c0_i32, %c0_i32_0, %c0_i32_1 : i32, i32, i32
  }
  func.func @transform_2(%arg0: i32) -> i32 {
    %c0_i32 = arith.constant 0 : i32
    %c0_i32_0 = arith.constant 0 : i32
    return %c0_i32 : i32
  }
  func.func @transform_3(%arg0: i32) -> (i32, i32, i32) {
    %c0_i32 = arith.constant 0 : i32
    %c0_i32_0 = arith.constant 0 : i32
    %c0_i32_1 = arith.constant 0 : i32
    return %arg0, %c0_i32, %c0_i32_0 : i32, i32, i32
  }
}

</mosaic_0001>

<llo_original>
// kernel: out_conv_pallas.1
$region0: #{out_conv_pallas.1}
  #allocation0 [shape = 'u32[]', space=smem, size = 0x4, offset = 0x4, fixed_abs, tag = 'smem constant byte address 0x4 - core index']
  #allocation1 [shape = 'u32[144,128]{1,0:T(1,128)}', space=vmem, size = 0x12000, scoped, tag = 'internal scratch']
  #allocation2 [shape = 'bf16[2,64,256]{2,1,0:T(8,128)(2,1)}', space=vmem, size = 0x10000, scoped, tag = 'scratch operand']
  #allocation3 [shape = 's32[2]{0}', space=sflag, size = 0x8, scoped, tag = 'scratch operand']
  #allocation6 [shape = 's32[]', space=sflag, size = 0x4, offset = 0, fixed_abs, tag = 'sflag constant byte address 0x0 - dummy sync flag']
  %s0 = inlined_call_operand.vmem [shape: bf16[64,896], index: 0, kind: input, shape index: {}]
  %s1 = inlined_call_operand.vmem [shape: bf16[9,16,64], index: 1, kind: input, shape index: {}]
  %s2 = inlined_call_operand.vmem [shape: f32[8], index: 2, kind: input, shape index: {}]
  %s3 = inlined_call_operand.vmem [shape: f32[6,1,128], index: 3, kind: output, shape index: {}]
  %s4 = sld [smem:[#allocation0]]
  $region79: #{out_conv_pallas.1} parent=0
    _
  %s6 = ssub.s32 1, %s4
  %s7 = scalar_select 0, %s6, %s4
  $region1: #{out_conv_pallas.1} parent=0
    #allocation4 [shape = 'u8[512]{0}', space=smem, size = 0x200, scoped, tag = 'input window, operand 2, single buffered']
    #allocation5 [shape = 's32[2]{0}', space=sflag, size = 0x8, scoped, tag = 'scoped memory for out_conv_pallas.1']
    %8 = vsyncpa [#allocation5], 0
    loop: start=0, step=1, limit=8
    $region2: #{out_conv_pallas.1} parent=1 // loop_pre_header
      _
    $region3: #{out_conv_pallas.1} parent=1 // loop_header
      %s10 = sphi 0, %s14
      %p11 = scmp.ge.s32.totalorder %s10, 8
      %s18 = sphi 0, %s18
      %s20 = sphi 0, %s18
      %s21 = sphi 0, %s20
      %s35 = sphi 0, %s21
      %s39 = sphi 0, %s39
      %s41 = sphi 0, %s39
      %s42 = sphi 0, %s41
      %s56 = sphi 0, %s42
      %s62 = sphi 0, %s64
      %s65 = sphi 0, %s62
      %s66 = sphi 0, %s65
      %s82 = sphi 0, %s66
    $region4: #{out_conv_pallas.1} parent=1 // loop_header_branch
      %13 = sbr.rel (%p11) target = $region8
    $region5: #{out_conv_pallas.1} parent=1 // loop_body
      %s15 = ssub.s32 %s10, 1
      %s16 = ssub.s32 %s10, 2
      %s17 = sadd.s32 %s10, 1
      %s19 = sadd.s32 %s18, 1
      %p22 = scmp.eq.s32.totalorder %s10, 5
      %p23 = scmp.ne.s32.totalorder %s18, %s20
      %p24 = scmp.eq.s32.totalorder %s10, 0
      %p25 = por %p23, %p24
      %p26 = scmp.ne.s32.totalorder %s18, %s20
      %p27 = scmp.eq.s32.totalorder %s15, 5
      %p28 = por %p26, %p27
      %p29 = scmp.ne.s32.totalorder %s20, %s21
      %p30 = scmp.eq.s32.totalorder %s15, 0
      %p31 = por %p29, %p30
      %p32 = scmp.ne.s32.totalorder %s20, %s21
      %p33 = scmp.eq.s32.totalorder %s16, 5
      %p34 = por %p32, %p33
      %p36 = scmp.ne.s32.totalorder %s21, %s35
      %p37 = scmp.eq.s32.totalorder %s16, 0
      %p38 = por %p36, %p37
      %s40 = sadd.s32 %s39, 1
      %p43 = scmp.eq.s32.totalorder %s10, 5
      %p44 = scmp.ne.s32.totalorder %s39, %s41
      %p45 = scmp.eq.s32.totalorder %s10, 0
      %p46 = por %p44, %p45
      %p47 = scmp.ne.s32.totalorder %s39, %s41
      %p48 = scmp.eq.s32.totalorder %s15, 5
      %p49 = por %p47, %p48
      %p50 = scmp.ne.s32.totalorder %s41, %s42
      %p51 = scmp.eq.s32.totalorder %s15, 0
      %p52 = por %p50, %p51
      %p53 = scmp.ne.s32.totalorder %s41, %s42
      %p54 = scmp.eq.s32.totalorder %s16, 5
      %p55 = por %p53, %p54
      %p57 = scmp.ne.s32.totalorder %s42, %s56
      %p58 = scmp.eq.s32.totalorder %s16, 0
      %p59 = por %p57, %p58
      %s60 = ssub.s32 %s10, %s17
      %p61 = scmp.eq.s32.totalorder %s60, 0
      %s63 = sadd.s32 %s62, 1
      %s64 = scalar_select %p61, %s62, %s63
      %p67 = pneg %p61
      %p68 = scmp.eq.s32.totalorder %s10, 5
      %p69 = por %p67, %p68
      %p70 = scmp.ne.s32.totalorder %s62, %s65
      %p71 = scmp.eq.s32.totalorder %s10, 0
      %p72 = por %p70, %p71
      %p73 = scmp.ne.s32.totalorder %s62, %s65
      %p74 = scmp.eq.s32.totalorder %s15, 5
      %p75 = por %p73, %p74
      %p76 = scmp.ne.s32.totalorder %s65, %s66
      %p77 = scmp.eq.s32.totalorder %s15, 0
      %p78 = por %p76, %p77
      %p79 = scmp.ne.s32.totalorder %s65, %s66
      %p80 = scmp.eq.s32.totalorder %s16, 5
      %p81 = por %p79, %p80
      %p83 = scmp.ne.s32.totalorder %s66, %s82
      %p84 = scmp.eq.s32.totalorder %s16, 0
      %p85 = por %p83, %p84
      %p86 = scmp.le.s32.totalorder 1, %s10
      %p87 = scmp.lt.s32.totalorder %s10, 7
      %p88 = pnand %p86, %p87
      %p89 = pneg %p88
      // Predicated region
      $region9: #{out_conv_pallas.1} parent=5 // pred_check
        _
      $region10: #{out_conv_pallas.1} parent=5 // pred_check_branch
        %91 = sbr.rel (%p88) target = $region12
      $region11: #{out_conv_pallas.1} parent=5 // pred_region
        %s92 = ssub.s32 %s10, 1
        // Predicated region
        $region13: #{out_conv_pallas.1} parent=11 // pred_check
          %p93 = pneg %p31
        $region14: #{out_conv_pallas.1} parent=11 // pred_check_branch
          %95 = sbr.rel (%p93) target = $region16
        $region15: #{out_conv_pallas.1} parent=11 // pred_region
          _
        $region16: #{out_conv_pallas.1} parent=11 // pred_fallthru
          _
        // Predicated region
        $region17: #{out_conv_pallas.1} parent=11 // pred_check
          %p96 = pneg %p52
        $region18: #{out_conv_pallas.1} parent=11 // pred_check_branch
          %98 = sbr.rel (%p96) target = $region20
        $region19: #{out_conv_pallas.1} parent=11 // pred_region
          %s100 = ssub.s32 16, 16
          %101 = vsyncadd [#allocation5], %s100
          %s103 = sshll.u32 %s2, 4
          %s104 = int_to_ptr.vmem [resolvable:$true] %s103
          %106 = dma.vmem_to_smem %s104, 16, [#allocation4], [#allocation5]
        $region20: #{out_conv_pallas.1} parent=11 // pred_fallthru
          _
      $region12: #{out_conv_pallas.1} parent=5 // pred_fallthru
        _
      %p107 = scmp.lt.s32.totalorder %s10, 6
      // Predicated region
      $region21: #{out_conv_pallas.1} parent=5 // pred_check
        %p108 = pneg %p107
      $region22: #{out_conv_pallas.1} parent=5 // pred_check_branch
        %110 = sbr.rel (%p108) target = $region24
      $region23: #{out_conv_pallas.1} parent=5 // pred_region
        _
      $region24: #{out_conv_pallas.1} parent=5 // pred_fallthru
        _
      %p111 = scmp.le.s32.totalorder 1, %s10
      %p112 = scmp.lt.s32.totalorder %s10, 7
      %p113 = pnand %p111, %p112
      %p114 = pneg %p113
      // Predicated region
      $region25: #{out_conv_pallas.1} parent=5 // pred_check
        _
      $region26: #{out_conv_pallas.1} parent=5 // pred_check_branch
        %116 = sbr.rel (%p113) target = $region28
      $region27: #{out_conv_pallas.1} parent=5 // pred_region
        %s117 = ssub.s32 %s10, 1
        // Predicated region
        $region29: #{out_conv_pallas.1} parent=27 // pred_check
          %p118 = pneg %p52
        $region30: #{out_conv_pallas.1} parent=27 // pred_check_branch
          %120 = sbr.rel (%p118) target = $region32
        $region31: #{out_conv_pallas.1} parent=27 // pred_region
          %121 = dma.done [#allocation5], 16
        $region32: #{out_conv_pallas.1} parent=27 // pred_fallthru
          _
        %122 = sfence
        %p123 = pneg %p31
        %p124 = pneg %p28
        %p125 = pneg %p52
        %p126 = pneg %p49
        %p127 = pneg %p78
        %p128 = pneg %p75
        %p129 = scmp.lt.s32.totalorder %s15, 5
        %s130 = scalar_select %p129, %s15, 5
        %s131 = scalar_lea.vmem %s3, %s130
        %p132 = scmp.lt.s32.totalorder %s15, 5
        %s133 = scalar_select %p132, %s15, 5
        %s134 = scalar_lea.vmem %s3, %s133
        %p136 = scmp.lt.s32.totalorder %s15, 0
        %s137 = ssub.s32 0, %s15
        %s138 = scalar_select %p136, %s137, %s15
        %s139 = sand.u32 %s138, 1
        %s140 = ssub.s32 0, %s139
        %s141 = scalar_select %p136, %s140, %s139
        %p142 = scmp.ne.s32.totalorder %s141, 0
        %p143 = scmp.lt.s32.totalorder %s141, 0
        %p144 = pnand %p143, %p142
        %p145 = pneg %p144
        %s146 = sadd.s32 %s141, 2
        %s147 = scalar_select %p145, %s146, %s141
        %s148 = smul.u32 %s15, 128
        %s149 = sshra.s32 %s148, 7
        %s150 = sand.u32 %s148, 127
        %s151 = smul.addr %s149, 4
        %s152 = scalar_lea.vmem %s0, %s151
        %s153 = smul.u32 %s147, 16
        %s154 = smul.addr %s153, 4
        %s155 = scalar_lea.vmem [#allocation2], %s154
        %s156 = scalar_lea.sflag [#allocation3], %s147
        %p158 = scmp.lt.u32.totalorder 8, 8
        %p159 = pneg %p158
        // Predicated region
        $region33: #{out_conv_pallas.1} parent=27 // pred_check
          _
        $region34: #{out_conv_pallas.1} parent=27 // pred_check_branch
          %161 = sbr.rel (%p158) target = $region36
        $region35: #{out_conv_pallas.1} parent=27 // pred_region
          %s191 = sand.u32 8, 7
          %p192 = scmp.eq.s32.totalorder %s191, 0
          // Predicated region
          $region48: #{out_conv_pallas.1} parent=35 // pred_check
            %p193 = pneg %p192
          $region49: #{out_conv_pallas.1} parent=35 // pred_check_branch
            %195 = sbr.rel (%p193) target = $region51
          $region50: #{out_conv_pallas.1} parent=35 // pred_region
            loop: start=0, step=1, limit=1
            $region52: #{out_conv_pallas.1} parent=50 // loop_pre_header
              _
            $region53: #{out_conv_pallas.1} parent=50 // loop_header
              %s197 = sphi 0, %s201
              %p198 = scmp.ge.s32.totalorder %s197, 1
              %s202 = sphi %s152, %s152
              %s203 = sphi %s155, %s155
            $region54: #{out_conv_pallas.1} parent=50 // loop_header_branch
              %200 = sbr.rel (%p198) target = $region58
            $region55: #{out_conv_pallas.1} parent=50 // loop_body
              %v204 = vld [vmem:[%s202] sm:$0xff]
              %205 = vst [vmem:[%s203] sm:$0xff] %v204
              %v206 = vld [vmem:[%s202 + $0x1c] sm:$0xff]
              %207 = vst [vmem:[%s203 + $0x8] sm:$0xff] %v206
              %v208 = vld [vmem:[%s202 + $0x38] sm:$0xff]
              %209 = vst [vmem:[%s203 + $0x10] sm:$0xff] %v208
              %v210 = vld [vmem:[%s202 + $0x54] sm:$0xff]
              %211 = vst [vmem:[%s203 + $0x18] sm:$0xff] %v210
              %v212 = vld [vmem:[%s202 + $0x70] sm:$0xff]
              %213 = vst [vmem:[%s203 + $0x20] sm:$0xff] %v212
              %v214 = vld [vmem:[%s202 + $0x8c] sm:$0xff]
              %215 = vst [vmem:[%s203 + $0x28] sm:$0xff] %v214
              %v216 = vld [vmem:[%s202 + $0xa8] sm:$0xff]
              %217 = vst [vmem:[%s203 + $0x30] sm:$0xff] %v216
              %v218 = vld [vmem:[%s202 + $0xc4] sm:$0xff]
              %219 = vst [vmem:[%s203 + $0x38] sm:$0xff] %v218
            $region56: #{out_conv_pallas.1} parent=50 // loop_footer
              %s201 = sadd.s32 1, %s197
            $region57: #{out_conv_pallas.1} parent=50 // loop_footer_branch
              %196 = sbr.rel target = $region53
            $region58: #{out_conv_pallas.1} parent=50 // loop_exit
              _
          $region51: #{out_conv_pallas.1} parent=35 // pred_fallthru
            _
          %p220 = pneg %p192
          // Predicated region
          $region59: #{out_conv_pallas.1} parent=35 // pred_check
            _
          $region60: #{out_conv_pallas.1} parent=35 // pred_check_branch
            %222 = sbr.rel (%p192) target = $region62
          $region61: #{out_conv_pallas.1} parent=35 // pred_region
            %s223 = sand.u32 8, 7
          $region62: #{out_conv_pallas.1} parent=35 // pred_fallthru
            _
        $region36: #{out_conv_pallas.1} parent=27 // pred_fallthru
          _
        // Predicated region
        $region37: #{out_conv_pallas.1} parent=27 // pred_check
          %p162 = pneg %p158
        $region38: #{out_conv_pallas.1} parent=27 // pred_check_branch
          %164 = sbr.rel (%p162) target = $region40
        $region39: #{out_conv_pallas.1} parent=27 // pred_region
          %s165 = sshll.u32 1, 8
          %s166 = ssub.s32 %s165, 1
          loop: start=0, step=1, limit=1
          $region41: #{out_conv_pallas.1} parent=39 // loop_pre_header
            _
          $region42: #{out_conv_pallas.1} parent=39 // loop_header
            %s168 = sphi 0, %s172
            %p169 = scmp.ge.s32.totalorder %s168, 1
            %s173 = sphi %s152, %s152
            %s174 = sphi %s155, %s155
          $region43: #{out_conv_pallas.1} parent=39 // loop_header_branch
            %171 = sbr.rel (%p169) target = $region47
          $region44: #{out_conv_pallas.1} parent=39 // loop_body
            %v175 = vld [vmem:[%s173] sm:%s166]
            %176 = vst [vmem:[%s174] sm:%s166] %v175
            %v177 = vld [vmem:[%s173 + $0x1c] sm:%s166]
            %178 = vst [vmem:[%s174 + $0x8] sm:%s166] %v177
            %v179 = vld [vmem:[%s173 + $0x38] sm:%s166]
            %180 = vst [vmem:[%s174 + $0x10] sm:%s166] %v179
            %v181 = vld [vmem:[%s173 + $0x54] sm:%s166]
            %182 = vst [vmem:[%s174 + $0x18] sm:%s166] %v181
            %v183 = vld [vmem:[%s173 + $0x70] sm:%s166]
            %184 = vst [vmem:[%s174 + $0x20] sm:%s166] %v183
            %v185 = vld [vmem:[%s173 + $0x8c] sm:%s166]
            %186 = vst [vmem:[%s174 + $0x28] sm:%s166] %v185
            %v187 = vld [vmem:[%s173 + $0xa8] sm:%s166]
            %188 = vst [vmem:[%s174 + $0x30] sm:%s166] %v187
            %v189 = vld [vmem:[%s173 + $0xc4] sm:%s166]
            %190 = vst [vmem:[%s174 + $0x38] sm:%s166] %v189
          $region45: #{out_conv_pallas.1} parent=39 // loop_footer
            %s172 = sadd.s32 1, %s168
          $region46: #{out_conv_pallas.1} parent=39 // loop_footer_branch
            %167 = sbr.rel target = $region42
          $region47: #{out_conv_pallas.1} parent=39 // loop_exit
            _
        $region40: #{out_conv_pallas.1} parent=27 // pred_fallthru
          _
        // Predicated region
        $region63: #{out_conv_pallas.1} parent=27 // pred_check
          _
        $region64: #{out_conv_pallas.1} parent=27 // pred_check_branch
          %226 = sbr.rel (0) target = $region66
        $region65: #{out_conv_pallas.1} parent=27 // pred_region
          %227 = vsyncadd %s156, 1024
        $region66: #{out_conv_pallas.1} parent=27 // pred_fallthru
          _
        %s228 = sld [smem:[#allocation4]]
        %s229 = sld [smem:[#allocation4 + $0x1]]
        %s230 = sld [smem:[#allocation4 + $0x2]]
        %s231 = sld [smem:[#allocation4 + $0x3]]
        %s232 = sld [smem:[#allocation4 + $0x4]]
        %s233 = smul.u32 4, 8
        %s234 = smul.u32 %s233, 2
        %s235 = sshll.u32 %s234, 4
        %236 = dma.done %s156, %s235
        %v237 = vld [vmem:[%s155] sm:$0xf]
        %v238 = vld [vmem:[%s155 + $0x8] sm:$0xf]
        %v239 = vld [vmem:[%s155 + $0x10] sm:$0xf]
        %v240 = vld [vmem:[%s155 + $0x18] sm:$0xf]
        %v241 = vld [vmem:[%s155 + $0x20] sm:$0xf]
        %v242 = vld [vmem:[%s155 + $0x28] sm:$0xf]
        %v243 = vld [vmem:[%s155 + $0x30] sm:$0xf]
        %v244 = vld [vmem:[%s155 + $0x38] sm:$0xf]
        %v245 = vld [vmem:[%s1] sm:$0xf]
        %v246 = vld [vmem:[%s1 + $0x4] sm:$0xf]
        %v247 = vld [vmem:[%s155] sm:$0xff]
        %v248 = vld [vmem:[%s155 + $0x8] sm:$0xff]
        %v249 = vld [vmem:[%s155 + $0x10] sm:$0xff]
        %v250 = vld [vmem:[%s155 + $0x18] sm:$0xff]
        %v251 = vld [vmem:[%s155 + $0x20] sm:$0xff]
        %v252 = vld [vmem:[%s155 + $0x28] sm:$0xff]
        %v253 = vld [vmem:[%s155 + $0x30] sm:$0xff]
        %v254 = vld [vmem:[%s155 + $0x38] sm:$0xff]
        %s255 = scalar_lea.vmem %s1, 8
        %v256 = vld [vmem:[%s255] sm:$0xf]
        %v257 = vld [vmem:[%s255 + $0x4] sm:$0xf]
        %v260 = vunpack.c.l.b16 %v256
        %v261 = vunpack.c.l.b16 %v257
        %v262 = vpack.c.b16 %v261, %v260
        %v271 = vunpack.c.l.b16 %v247
        %v272 = vunpack.c.h.b16 %v247
        %v273 = vunpack.c.l.b16 %v248
        %v274 = vunpack.c.h.b16 %v248
        %v275 = vunpack.c.l.b16 %v249
        %v276 = vunpack.c.h.b16 %v249
        %v277 = vunpack.c.l.b16 %v250
        %v278 = vunpack.c.h.b16 %v250
        %v279 = vunpack.c.l.b16 %v251
        %v280 = vunpack.c.h.b16 %v251
        %v281 = vunpack.c.l.b16 %v252
        %v282 = vunpack.c.h.b16 %v252
        %v283 = vunpack.c.l.b16 %v253
        %v284 = vunpack.c.h.b16 %v253
        %v285 = vunpack.c.l.b16 %v254
        %v286 = vunpack.c.h.b16 %v254
        %v287 = vpack.c.b16 %v273, %v271
        %v288 = vpack.c.b16 %v274, %v272
        %v289 = vpack.c.b16 %v277, %v275
        %v290 = vpack.c.b16 %v278, %v276
        %v291 = vpack.c.b16 %v281, %v279
        %v292 = vpack.c.b16 %v282, %v280
        %v293 = vpack.c.b16 %v285, %v283
        %v294 = vpack.c.b16 %v286, %v284
        %295 = vrot.lane.b32.xlu0 %v287, 127
        %v296 = vpop.permute.xlu0 %295
        %297 = vrot.lane.b32.xlu0 %v288, 127
        %v298 = vpop.permute.xlu0 %297
        %299 = vrot.lane.b32.xlu0 %v289, 127
        %v300 = vpop.permute.xlu0 %299
        %301 = vrot.lane.b32.xlu0 %v290, 127
        %v302 = vpop.permute.xlu0 %301
        %303 = vrot.lane.b32.xlu0 %v291, 127
        %v304 = vpop.permute.xlu0 %303
        %305 = vrot.lane.b32.xlu0 %v292, 127
        %v306 = vpop.permute.xlu0 %305
        %307 = vrot.lane.b32.xlu0 %v293, 127
        %v308 = vpop.permute.xlu0 %307
        %309 = vrot.lane.b32.xlu0 %v294, 127
        %v310 = vpop.permute.xlu0 %309
        %vm311 = vcmask 1039360
        %v312 = vsel %vm311, %v296, %v298
        %v313 = vsel %vm311, %v300, %v302
        %v314 = vsel %vm311, %v304, %v306
        %v315 = vsel %vm311, %v308, %v310
        %vm320 = vcmask 523264
        %v322 = vsel %vm320, %v262, 0
        %324 = vmatprep.subr.bf16.mxu0 0
        %325 = vmatpush1.bf16.msra.mxu0 0
        %326 = vmatprep.subr.bf16.mxu0 0
        %327 = vmatpush1.bf16.msra.mxu0 0
        %328 = vmatprep.subr.bf16.mxu0 0
        %329 = vmatpush1.bf16.msra.mxu0 0
        %330 = vmatprep.subr.bf16.mxu0 0
        %331 = vmatpush1.bf16.msra.mxu0 0
        %332 = vmatprep.subr.bf16.mxu0 0
        %333 = vmatpush1.bf16.msra.mxu0 %v315
        %334 = vmatprep.subr.bf16.mxu0 0
        %335 = vmatpush1.bf16.msra.mxu0 %v314
        %336 = vmatprep.subr.bf16.mxu0 0
        %337 = vmatpush1.bf16.msra.mxu0 %v313
        %338 = vmatprep.subr.bf16.mxu0 0
        %339 = vmatpush1.bf16.msra.mxu0 %v312
        %340 = vmatprep.subr.bf16.mxu0 0
        %341 = vmatpush2.bf16.msra.mxu0 0
        %342 = vmatprep.subr.bf16.mxu0 0
        %343 = vmatpush2.bf16.msra.mxu0 0
        %344 = vmatprep.subr.bf16.mxu0 0
        %345 = vmatpush2.bf16.msra.mxu0 0
        %346 = vmatprep.subr.bf16.mxu0 0
        %347 = vmatpush2.bf16.msra.mxu0 0
        %348 = vmatprep.subr.bf16.mxu0 0
        %349 = vmatpush2.bf16.msra.mxu0 0
        %350 = vmatprep.subr.bf16.mxu0 0
        %351 = vmatpush2.bf16.msra.mxu0 0
        %352 = vmatprep.subr.bf16.mxu0 0
        %353 = vmatpush2.bf16.msra.mxu0 0
        %354 = vmatprep.subr.bf16.mxu0 0
        %355 = vmatpush2.bf16.msra.mxu0 0
        %356 = vmatprep.mubr.bf16.mxu0 0
        %357 = vmatmul.mubr.bf16.gmra.mxu0 %v322
        %v358 = vpop.f32.mrf.mxu0
        %v359 = vadd.f32 0.0, %v358
        %v360 = vpop.f32.mrf.mxu0
        %v361 = vpop.f32.mrf.mxu0
        %v362 = vpop.f32.mrf.mxu0
        %363 = vdwg.mxu0
        %v366 = vunpack.c.l.b16 %v245
        %v367 = vunpack.c.l.b16 %v246
        %v368 = vpack.c.b16 %v367, %v366
        %v377 = vunpack.c.l.b16 %v237
        %v378 = vunpack.c.l.b16 %v238
        %v379 = vunpack.c.l.b16 %v239
        %v380 = vunpack.c.l.b16 %v240
        %v381 = vunpack.c.l.b16 %v241
        %v382 = vunpack.c.l.b16 %v242
        %v383 = vunpack.c.l.b16 %v243
        %v384 = vunpack.c.l.b16 %v244
        %v385 = vpack.c.b16 %v378, %v377
        %v386 = vpack.c.b16 %v380, %v379
        %v387 = vpack.c.b16 %v382, %v381
        %v388 = vpack.c.b16 %v384, %v383
        %v394 = vsel %vm320, %v368, 0
        %396 = vmatprep.subr.bf16.mxu0 0
        %397 = vmatpush1.bf16.msra.mxu0 0
        %398 = vmatprep.subr.bf16.mxu0 0
        %399 = vmatpush1.bf16.msra.mxu0 0
        %400 = vmatprep.subr.bf16.mxu0 0
        %401 = vmatpush1.bf16.msra.mxu0 0
        %402 = vmatprep.subr.bf16.mxu0 0
        %403 = vmatpush1.bf16.msra.mxu0 0
        %404 = vmatprep.subr.bf16.mxu0 0
        %405 = vmatpush1.bf16.msra.mxu0 %v388
        %406 = vmatprep.subr.bf16.mxu0 0
        %407 = vmatpush1.bf16.msra.mxu0 %v387
        %408 = vmatprep.subr.bf16.mxu0 0
        %409 = vmatpush1.bf16.msra.mxu0 %v386
        %410 = vmatprep.subr.bf16.mxu0 0
        %411 = vmatpush1.bf16.msra.mxu0 %v385
        %412 = vmatprep.subr.bf16.mxu0 0
        %413 = vmatpush2.bf16.msra.mxu0 0
        %414 = vmatprep.subr.bf16.mxu0 0
        %415 = vmatpush2.bf16.msra.mxu0 0
        %416 = vmatprep.subr.bf16.mxu0 0
        %417 = vmatpush2.bf16.msra.mxu0 0
        %418 = vmatprep.subr.bf16.mxu0 0
        %419 = vmatpush2.bf16.msra.mxu0 0
        %420 = vmatprep.subr.bf16.mxu0 0
        %421 = vmatpush2.bf16.msra.mxu0 0
        %422 = vmatprep.subr.bf16.mxu0 0
        %423 = vmatpush2.bf16.msra.mxu0 0
        %424 = vmatprep.subr.bf16.mxu0 0
        %425 = vmatpush2.bf16.msra.mxu0 0
        %426 = vmatprep.subr.bf16.mxu0 0
        %427 = vmatpush2.bf16.msra.mxu0 0
        %428 = vmatprep.mubr.bf16.mxu0 0
        %429 = vmatmul.mubr.bf16.gmra.mxu0 %v394
        %v430 = vpop.f32.mrf.mxu0
        %v431 = vadd.f32 %v359, %v430
        %v432 = vpop.f32.mrf.mxu0
        %v433 = vpop.f32.mrf.mxu0
        %v434 = vpop.f32.mrf.mxu0
        %435 = vdwg.mxu0
        %s436 = scalar_lea.vmem %s1, 16
        %v437 = vld [vmem:[%s436] sm:$0xf]
        %v438 = vld [vmem:[%s436 + $0x4] sm:$0xf]
        %v441 = vunpack.c.l.b16 %v437
        %v442 = vunpack.c.l.b16 %v438
        %v443 = vpack.c.b16 %v442, %v441
        %444 = vrot.lane.b32.xlu0 %v287, 126
        %v445 = vpop.permute.xlu0 %444
        %446 = vrot.lane.b32.xlu0 %v288, 126
        %v447 = vpop.permute.xlu0 %446
        %448 = vrot.lane.b32.xlu0 %v289, 126
        %v449 = vpop.permute.xlu0 %448
        %450 = vrot.lane.b32.xlu0 %v290, 126
        %v451 = vpop.permute.xlu0 %450
        %452 = vrot.lane.b32.xlu0 %v291, 126
        %v453 = vpop.permute.xlu0 %452
        %454 = vrot.lane.b32.xlu0 %v292, 126
        %v455 = vpop.permute.xlu0 %454
        %456 = vrot.lane.b32.xlu0 %v293, 126
        %v457 = vpop.permute.xlu0 %456
        %458 = vrot.lane.b32.xlu0 %v294, 126
        %v459 = vpop.permute.xlu0 %458
        %vm460 = vcmask 1031168
        %v461 = vsel %vm460, %v445, %v447
        %v462 = vsel %vm460, %v449, %v451
        %v463 = vsel %vm460, %v453, %v455
        %v464 = vsel %vm460, %v457, %v459
        %v470 = vsel %vm320, %v443, 0
        %472 = vmatprep.subr.bf16.mxu0 0
        %473 = vmatpush1.bf16.msra.mxu0 0
        %474 = vmatprep.subr.bf16.mxu0 0
        %475 = vmatpush1.bf16.msra.mxu0 0
        %476 = vmatprep.subr.bf16.mxu0 0
        %477 = vmatpush1.bf16.msra.mxu0 0
        %478 = vmatprep.subr.bf16.mxu0 0
        %479 = vmatpush1.bf16.msra.mxu0 0
        %480 = vmatprep.subr.bf16.mxu0 0
        %481 = vmatpush1.bf16.msra.mxu0 %v464
        %482 = vmatprep.subr.bf16.mxu0 0
        %483 = vmatpush1.bf16.msra.mxu0 %v463
        %484 = vmatprep.subr.bf16.mxu0 0
        %485 = vmatpush1.bf16.msra.mxu0 %v462
        %486 = vmatprep.subr.bf16.mxu0 0
        %487 = vmatpush1.bf16.msra.mxu0 %v461
        %488 = vmatprep.subr.bf16.mxu0 0
        %489 = vmatpush2.bf16.msra.mxu0 0
        %490 = vmatprep.subr.bf16.mxu0 0
        %491 = vmatpush2.bf16.msra.mxu0 0
        %492 = vmatprep.subr.bf16.mxu0 0
        %493 = vmatpush2.bf16.msra.mxu0 0
        %494 = vmatprep.subr.bf16.mxu0 0
        %495 = vmatpush2.bf16.msra.mxu0 0
        %496 = vmatprep.subr.bf16.mxu0 0
        %497 = vmatpush2.bf16.msra.mxu0 0
        %498 = vmatprep.subr.bf16.mxu0 0
        %499 = vmatpush2.bf16.msra.mxu0 0
        %500 = vmatprep.subr.bf16.mxu0 0
        %501 = vmatpush2.bf16.msra.mxu0 0
        %502 = vmatprep.subr.bf16.mxu0 0
        %503 = vmatpush2.bf16.msra.mxu0 0
        %504 = vmatprep.mubr.bf16.mxu0 0
        %505 = vmatmul.mubr.bf16.gmra.mxu0 %v470
        %v506 = vpop.f32.mrf.mxu0
        %v507 = vadd.f32 0.0, %v506
        %v508 = vpop.f32.mrf.mxu0
        %v509 = vpop.f32.mrf.mxu0
        %v510 = vpop.f32.mrf.mxu0
        %511 = vdwg.mxu0
        %v512 = vadd.f32 %v431, %v507
        %s513 = scalar_lea.vmem %s1, 24
        %v514 = vld [vmem:[%s513] sm:$0xf]
        %v515 = vld [vmem:[%s513 + $0x4] sm:$0xf]
        %v518 = vunpack.c.l.b16 %v514
        %v519 = vunpack.c.l.b16 %v515
        %v520 = vpack.c.b16 %v519, %v518
        %521 = vrot.lane.b32.xlu0 %v287, 110
        %v522 = vpop.permute.xlu0 %521
        %523 = vrot.lane.b32.xlu0 %v288, 110
        %v524 = vpop.permute.xlu0 %523
        %525 = vrot.lane.b32.xlu0 %v289, 110
        %v526 = vpop.permute.xlu0 %525
        %527 = vrot.lane.b32.xlu0 %v290, 110
        %v528 = vpop.permute.xlu0 %527
        %529 = vrot.lane.b32.xlu0 %v291, 110
        %v530 = vpop.permute.xlu0 %529
        %531 = vrot.lane.b32.xlu0 %v292, 110
        %v532 = vpop.permute.xlu0 %531
        %533 = vrot.lane.b32.xlu0 %v293, 110
        %v534 = vpop.permute.xlu0 %533
        %535 = vrot.lane.b32.xlu0 %v294, 110
        %v536 = vpop.permute.xlu0 %535
        %vm537 = vcmask 900096
        %v538 = vsel %vm537, %v522, %v524
        %v539 = vsel %vm537, %v526, %v528
        %v540 = vsel %vm537, %v530, %v532
        %v541 = vsel %vm537, %v534, %v536
        %v547 = vsel %vm320, %v520, 0
        %549 = vmatprep.subr.bf16.mxu0 0
        %550 = vmatpush1.bf16.msra.mxu0 0
        %551 = vmatprep.subr.bf16.mxu0 0
        %552 = vmatpush1.bf16.msra.mxu0 0
        %553 = vmatprep.subr.bf16.mxu0 0
        %554 = vmatpush1.bf16.msra.mxu0 0
        %555 = vmatprep.subr.bf16.mxu0 0
        %556 = vmatpush1.bf16.msra.mxu0 0
        %557 = vmatprep.subr.bf16.mxu0 0
        %558 = vmatpush1.bf16.msra.mxu0 %v541
        %559 = vmatprep.subr.bf16.mxu0 0
        %560 = vmatpush1.bf16.msra.mxu0 %v540
        %561 = vmatprep.subr.bf16.mxu0 0
        %562 = vmatpush1.bf16.msra.mxu0 %v539
        %563 = vmatprep.subr.bf16.mxu0 0
        %564 = vmatpush1.bf16.msra.mxu0 %v538
        %565 = vmatprep.subr.bf16.mxu0 0
        %566 = vmatpush2.bf16.msra.mxu0 0
        %567 = vmatprep.subr.bf16.mxu0 0
        %568 = vmatpush2.bf16.msra.mxu0 0
        %569 = vmatprep.subr.bf16.mxu0 0
        %570 = vmatpush2.bf16.msra.mxu0 0
        %571 = vmatprep.subr.bf16.mxu0 0
        %572 = vmatpush2.bf16.msra.mxu0 0
        %573 = vmatprep.subr.bf16.mxu0 0
        %574 = vmatpush2.bf16.msra.mxu0 0
        %575 = vmatprep.subr.bf16.mxu0 0
        %576 = vmatpush2.bf16.msra.mxu0 0
        %577 = vmatprep.subr.bf16.mxu0 0
        %578 = vmatpush2.bf16.msra.mxu0 0
        %579 = vmatprep.subr.bf16.mxu0 0
        %580 = vmatpush2.bf16.msra.mxu0 0
        %581 = vmatprep.mubr.bf16.mxu0 0
        %582 = vmatmul.mubr.bf16.gmra.mxu0 %v547
        %v583 = vpop.f32.mrf.mxu0
        %v584 = vadd.f32 0.0, %v583
        %v585 = vpop.f32.mrf.mxu0
        %v586 = vpop.f32.mrf.mxu0
        %v587 = vpop.f32.mrf.mxu0
        %588 = vdwg.mxu0
        %v589 = vadd.f32 %v512, %v584
        %s590 = scalar_lea.vmem %s1, 32
        %v591 = vld [vmem:[%s590] sm:$0xf]
        %v592 = vld [vmem:[%s590 + $0x4] sm:$0xf]
        %v595 = vunpack.c.l.b16 %v591
        %v596 = vunpack.c.l.b16 %v592
        %v597 = vpack.c.b16 %v596, %v595
        %598 = vrot.lane.b32.xlu0 %v287, 109
        %v599 = vpop.permute.xlu0 %598
        %600 = vrot.lane.b32.xlu0 %v288, 109
        %v601 = vpop.permute.xlu0 %600
        %602 = vrot.lane.b32.xlu0 %v289, 109
        %v603 = vpop.permute.xlu0 %602
        %604 = vrot.lane.b32.xlu0 %v290, 109
        %v605 = vpop.permute.xlu0 %604
        %606 = vrot.lane.b32.xlu0 %v291, 109
        %v607 = vpop.permute.xlu0 %606
        %608 = vrot.lane.b32.xlu0 %v292, 109
        %v609 = vpop.permute.xlu0 %608
        %610 = vrot.lane.b32.xlu0 %v293, 109
        %v611 = vpop.permute.xlu0 %610
        %612 = vrot.lane.b32.xlu0 %v294, 109
        %v613 = vpop.permute.xlu0 %612
        %vm614 = vcmask 891904
        %v615 = vsel %vm614, %v599, %v601
        %v616 = vsel %vm614, %v603, %v605
        %v617 = vsel %vm614, %v607, %v609
        %v618 = vsel %vm614, %v611, %v613
        %v624 = vsel %vm320, %v597, 0
        %626 = vmatprep.subr.bf16.mxu0 0
        %627 = vmatpush1.bf16.msra.mxu0 0
        %628 = vmatprep.subr.bf16.mxu0 0
        %629 = vmatpush1.bf16.msra.mxu0 0
        %630 = vmatprep.subr.bf16.mxu0 0
        %631 = vmatpush1.bf16.msra.mxu0 0
        %632 = vmatprep.subr.bf16.mxu0 0
        %633 = vmatpush1.bf16.msra.mxu0 0
        %634 = vmatprep.subr.bf16.mxu0 0
        %635 = vmatpush1.bf16.msra.mxu0 %v618
        %636 = vmatprep.subr.bf16.mxu0 0
        %637 = vmatpush1.bf16.msra.mxu0 %v617
        %638 = vmatprep.subr.bf16.mxu0 0
        %639 = vmatpush1.bf16.msra.mxu0 %v616
        %640 = vmatprep.subr.bf16.mxu0 0
        %641 = vmatpush1.bf16.msra.mxu0 %v615
        %642 = vmatprep.subr.bf16.mxu0 0
        %643 = vmatpush2.bf16.msra.mxu0 0
        %644 = vmatprep.subr.bf16.mxu0 0
        %645 = vmatpush2.bf16.msra.mxu0 0
        %646 = vmatprep.subr.bf16.mxu0 0
        %647 = vmatpush2.bf16.msra.mxu0 0
        %648 = vmatprep.subr.bf16.mxu0 0
        %649 = vmatpush2.bf16.msra.mxu0 0
        %650 = vmatprep.subr.bf16.mxu0 0
        %651 = vmatpush2.bf16.msra.mxu0 0
        %652 = vmatprep.subr.bf16.mxu0 0
        %653 = vmatpush2.bf16.msra.mxu0 0
        %654 = vmatprep.subr.bf16.mxu0 0
        %655 = vmatpush2.bf16.msra.mxu0 0
        %656 = vmatprep.subr.bf16.mxu0 0
        %657 = vmatpush2.bf16.msra.mxu0 0
        %658 = vmatprep.mubr.bf16.mxu0 0
        %659 = vmatmul.mubr.bf16.gmra.mxu0 %v624
        %v660 = vpop.f32.mrf.mxu0
        %v661 = vadd.f32 0.0, %v660
        %v662 = vpop.f32.mrf.mxu0
        %v663 = vpop.f32.mrf.mxu0
        %v664 = vpop.f32.mrf.mxu0
        %665 = vdwg.mxu0
        %v666 = vadd.f32 %v589, %v661
        %s667 = scalar_lea.vmem %s1, 40
        %v668 = vld [vmem:[%s667] sm:$0xf]
        %v669 = vld [vmem:[%s667 + $0x4] sm:$0xf]
        %v672 = vunpack.c.l.b16 %v668
        %v673 = vunpack.c.l.b16 %v669
        %v674 = vpack.c.b16 %v673, %v672
        %675 = vrot.lane.b32.xlu0 %v287, 108
        %v676 = vpop.permute.xlu0 %675
        %677 = vrot.lane.b32.xlu0 %v288, 108
        %v678 = vpop.permute.xlu0 %677
        %679 = vrot.lane.b32.xlu0 %v289, 108
        %v680 = vpop.permute.xlu0 %679
        %681 = vrot.lane.b32.xlu0 %v290, 108
        %v682 = vpop.permute.xlu0 %681
        %683 = vrot.lane.b32.xlu0 %v291, 108
        %v684 = vpop.permute.xlu0 %683
        %685 = vrot.lane.b32.xlu0 %v292, 108
        %v686 = vpop.permute.xlu0 %685
        %687 = vrot.lane.b32.xlu0 %v293, 108
        %v688 = vpop.permute.xlu0 %687
        %689 = vrot.lane.b32.xlu0 %v294, 108
        %v690 = vpop.permute.xlu0 %689
        %vm691 = vcmask 883712
        %v692 = vsel %vm691, %v676, %v678
        %v693 = vsel %vm691, %v680, %v682
        %v694 = vsel %vm691, %v684, %v686
        %v695 = vsel %vm691, %v688, %v690
        %v701 = vsel %vm320, %v674, 0
        %703 = vmatprep.subr.bf16.mxu0 0
        %704 = vmatpush1.bf16.msra.mxu0 0
        %705 = vmatprep.subr.bf16.mxu0 0
        %706 = vmatpush1.bf16.msra.mxu0 0
        %707 = vmatprep.subr.bf16.mxu0 0
        %708 = vmatpush1.bf16.msra.mxu0 0
        %709 = vmatprep.subr.bf16.mxu0 0
        %710 = vmatpush1.bf16.msra.mxu0 0
        %711 = vmatprep.subr.bf16.mxu0 0
        %712 = vmatpush1.bf16.msra.mxu0 %v695
        %713 = vmatprep.subr.bf16.mxu0 0
        %714 = vmatpush1.bf16.msra.mxu0 %v694
        %715 = vmatprep.subr.bf16.mxu0 0
        %716 = vmatpush1.bf16.msra.mxu0 %v693
        %717 = vmatprep.subr.bf16.mxu0 0
        %718 = vmatpush1.bf16.msra.mxu0 %v692
        %719 = vmatprep.subr.bf16.mxu0 0
        %720 = vmatpush2.bf16.msra.mxu0 0
        %721 = vmatprep.subr.bf16.mxu0 0
        %722 = vmatpush2.bf16.msra.mxu0 0
        %723 = vmatprep.subr.bf16.mxu0 0
        %724 = vmatpush2.bf16.msra.mxu0 0
        %725 = vmatprep.subr.bf16.mxu0 0
        %726 = vmatpush2.bf16.msra.mxu0 0
        %727 = vmatprep.subr.bf16.mxu0 0
        %728 = vmatpush2.bf16.msra.mxu0 0
        %729 = vmatprep.subr.bf16.mxu0 0
        %730 = vmatpush2.bf16.msra.mxu0 0
        %731 = vmatprep.subr.bf16.mxu0 0
        %732 = vmatpush2.bf16.msra.mxu0 0
        %733 = vmatprep.subr.bf16.mxu0 0
        %734 = vmatpush2.bf16.msra.mxu0 0
        %735 = vmatprep.mubr.bf16.mxu0 0
        %736 = vmatmul.mubr.bf16.gmra.mxu0 %v701
        %v737 = vpop.f32.mrf.mxu0
        %v738 = vadd.f32 0.0, %v737
        %v739 = vpop.f32.mrf.mxu0
        %v740 = vpop.f32.mrf.mxu0
        %v741 = vpop.f32.mrf.mxu0
        %742 = vdwg.mxu0
        %v743 = vadd.f32 %v666, %v738
        %s744 = scalar_lea.vmem %s1, 48
        %v745 = vld [vmem:[%s744] sm:$0xf]
        %v746 = vld [vmem:[%s744 + $0x4] sm:$0xf]
        %v749 = vunpack.c.l.b16 %v745
        %v750 = vunpack.c.l.b16 %v746
        %v751 = vpack.c.b16 %v750, %v749
        %752 = vrot.lane.b32.xlu0 %v287, 92
        %v753 = vpop.permute.xlu0 %752
        %754 = vrot.lane.b32.xlu0 %v288, 92
        %v755 = vpop.permute.xlu0 %754
        %756 = vrot.lane.b32.xlu0 %v289, 92
        %v757 = vpop.permute.xlu0 %756
        %758 = vrot.lane.b32.xlu0 %v290, 92
        %v759 = vpop.permute.xlu0 %758
        %760 = vrot.lane.b32.xlu0 %v291, 92
        %v761 = vpop.permute.xlu0 %760
        %762 = vrot.lane.b32.xlu0 %v292, 92
        %v763 = vpop.permute.xlu0 %762
        %764 = vrot.lane.b32.xlu0 %v293, 92
        %v765 = vpop.permute.xlu0 %764
        %766 = vrot.lane.b32.xlu0 %v294, 92
        %v767 = vpop.permute.xlu0 %766
        %vm768 = vcmask 752640
        %v769 = vsel %vm768, %v753, %v755
        %v770 = vsel %vm768, %v757, %v759
        %v771 = vsel %vm768, %v761, %v763
        %v772 = vsel %vm768, %v765, %v767
        %v778 = vsel %vm320, %v751, 0
        %780 = vmatprep.subr.bf16.mxu0 0
        %781 = vmatpush1.bf16.msra.mxu0 0
        %782 = vmatprep.subr.bf16.mxu0 0
        %783 = vmatpush1.bf16.msra.mxu0 0
        %784 = vmatprep.subr.bf16.mxu0 0
        %785 = vmatpush1.bf16.msra.mxu0 0
        %786 = vmatprep.subr.bf16.mxu0 0
        %787 = vmatpush1.bf16.msra.mxu0 0
        %788 = vmatprep.subr.bf16.mxu0 0
        %789 = vmatpush1.bf16.msra.mxu0 %v772
        %790 = vmatprep.subr.bf16.mxu0 0
        %791 = vmatpush1.bf16.msra.mxu0 %v771
        %792 = vmatprep.subr.bf16.mxu0 0
        %793 = vmatpush1.bf16.msra.mxu0 %v770
        %794 = vmatprep.subr.bf16.mxu0 0
        %795 = vmatpush1.bf16.msra.mxu0 %v769
        %796 = vmatprep.subr.bf16.mxu0 0
        %797 = vmatpush2.bf16.msra.mxu0 0
        %798 = vmatprep.subr.bf16.mxu0 0
        %799 = vmatpush2.bf16.msra.mxu0 0
        %800 = vmatprep.subr.bf16.mxu0 0
        %801 = vmatpush2.bf16.msra.mxu0 0
        %802 = vmatprep.subr.bf16.mxu0 0
        %803 = vmatpush2.bf16.msra.mxu0 0
        %804 = vmatprep.subr.bf16.mxu0 0
        %805 = vmatpush2.bf16.msra.mxu0 0
        %806 = vmatprep.subr.bf16.mxu0 0
        %807 = vmatpush2.bf16.msra.mxu0 0
        %808 = vmatprep.subr.bf16.mxu0 0
        %809 = vmatpush2.bf16.msra.mxu0 0
        %810 = vmatprep.subr.bf16.mxu0 0
        %811 = vmatpush2.bf16.msra.mxu0 0
        %812 = vmatprep.mubr.bf16.mxu0 0
        %813 = vmatmul.mubr.bf16.gmra.mxu0 %v778
        %v814 = vpop.f32.mrf.mxu0
        %v815 = vadd.f32 0.0, %v814
        %v816 = vpop.f32.mrf.mxu0
        %v817 = vpop.f32.mrf.mxu0
        %v818 = vpop.f32.mrf.mxu0
        %819 = vdwg.mxu0
        %v820 = vadd.f32 %v743, %v815
        %s821 = scalar_lea.vmem %s1, 56
        %v822 = vld [vmem:[%s821] sm:$0xf]
        %v823 = vld [vmem:[%s821 + $0x4] sm:$0xf]
        %v826 = vunpack.c.l.b16 %v822
        %v827 = vunpack.c.l.b16 %v823
        %v828 = vpack.c.b16 %v827, %v826
        %829 = vrot.lane.b32.xlu0 %v287, 91
        %v830 = vpop.permute.xlu0 %829
        %831 = vrot.lane.b32.xlu0 %v288, 91
        %v832 = vpop.permute.xlu0 %831
        %833 = vrot.lane.b32.xlu0 %v289, 91
        %v834 = vpop.permute.xlu0 %833
        %835 = vrot.lane.b32.xlu0 %v290, 91
        %v836 = vpop.permute.xlu0 %835
        %837 = vrot.lane.b32.xlu0 %v291, 91
        %v838 = vpop.permute.xlu0 %837
        %839 = vrot.lane.b32.xlu0 %v292, 91
        %v840 = vpop.permute.xlu0 %839
        %841 = vrot.lane.b32.xlu0 %v293, 91
        %v842 = vpop.permute.xlu0 %841
        %843 = vrot.lane.b32.xlu0 %v294, 91
        %v844 = vpop.permute.xlu0 %843
        %vm845 = vcmask 744448
        %v846 = vsel %vm845, %v830, %v832
        %v847 = vsel %vm845, %v834, %v836
        %v848 = vsel %vm845, %v838, %v840
        %v849 = vsel %vm845, %v842, %v844
        %v855 = vsel %vm320, %v828, 0
        %857 = vmatprep.subr.bf16.mxu0 0
        %858 = vmatpush1.bf16.msra.mxu0 0
        %859 = vmatprep.subr.bf16.mxu0 0
        %860 = vmatpush1.bf16.msra.mxu0 0
        %861 = vmatprep.subr.bf16.mxu0 0
        %862 = vmatpush1.bf16.msra.mxu0 0
        %863 = vmatprep.subr.bf16.mxu0 0
        %864 = vmatpush1.bf16.msra.mxu0 0
        %865 = vmatprep.subr.bf16.mxu0 0
        %866 = vmatpush1.bf16.msra.mxu0 %v849
        %867 = vmatprep.subr.bf16.mxu0 0
        %868 = vmatpush1.bf16.msra.mxu0 %v848
        %869 = vmatprep.subr.bf16.mxu0 0
        %870 = vmatpush1.bf16.msra.mxu0 %v847
        %871 = vmatprep.subr.bf16.mxu0 0
        %872 = vmatpush1.bf16.msra.mxu0 %v846
        %873 = vmatprep.subr.bf16.mxu0 0
        %874 = vmatpush2.bf16.msra.mxu0 0
        %875 = vmatprep.subr.bf16.mxu0 0
        %876 = vmatpush2.bf16.msra.mxu0 0
        %877 = vmatprep.subr.bf16.mxu0 0
        %878 = vmatpush2.bf16.msra.mxu0 0
        %879 = vmatprep.subr.bf16.mxu0 0
        %880 = vmatpush2.bf16.msra.mxu0 0
        %881 = vmatprep.subr.bf16.mxu0 0
        %882 = vmatpush2.bf16.msra.mxu0 0
        %883 = vmatprep.subr.bf16.mxu0 0
        %884 = vmatpush2.bf16.msra.mxu0 0
        %885 = vmatprep.subr.bf16.mxu0 0
        %886 = vmatpush2.bf16.msra.mxu0 0
        %887 = vmatprep.subr.bf16.mxu0 0
        %888 = vmatpush2.bf16.msra.mxu0 0
        %889 = vmatprep.mubr.bf16.mxu0 0
        %890 = vmatmul.mubr.bf16.gmra.mxu0 %v855
        %v891 = vpop.f32.mrf.mxu0
        %v892 = vadd.f32 0.0, %v891
        %v893 = vpop.f32.mrf.mxu0
        %v894 = vpop.f32.mrf.mxu0
        %v895 = vpop.f32.mrf.mxu0
        %896 = vdwg.mxu0
        %v897 = vadd.f32 %v820, %v892
        %s898 = scalar_lea.vmem %s1, 64
        %v899 = vld [vmem:[%s898] sm:$0xf]
        %v900 = vld [vmem:[%s898 + $0x4] sm:$0xf]
        %v903 = vunpack.c.l.b16 %v899
        %v904 = vunpack.c.l.b16 %v900
        %v905 = vpack.c.b16 %v904, %v903
        %906 = vrot.lane.b32.xlu0 %v287, 90
        %v907 = vpop.permute.xlu0 %906
        %908 = vrot.lane.b32.xlu0 %v288, 90
        %v909 = vpop.permute.xlu0 %908
        %910 = vrot.lane.b32.xlu0 %v289, 90
        %v911 = vpop.permute.xlu0 %910
        %912 = vrot.lane.b32.xlu0 %v290, 90
        %v913 = vpop.permute.xlu0 %912
        %914 = vrot.lane.b32.xlu0 %v291, 90
        %v915 = vpop.permute.xlu0 %914
        %916 = vrot.lane.b32.xlu0 %v292, 90
        %v917 = vpop.permute.xlu0 %916
        %918 = vrot.lane.b32.xlu0 %v293, 90
        %v919 = vpop.permute.xlu0 %918
        %920 = vrot.lane.b32.xlu0 %v294, 90
        %v921 = vpop.permute.xlu0 %920
        %vm922 = vcmask 736256
        %v923 = vsel %vm922, %v907, %v909
        %v924 = vsel %vm922, %v911, %v913
        %v925 = vsel %vm922, %v915, %v917
        %v926 = vsel %vm922, %v919, %v921
        %v932 = vsel %vm320, %v905, 0
        %934 = vmatprep.subr.bf16.mxu0 0
        %935 = vmatpush1.bf16.msra.mxu0 0
        %936 = vmatprep.subr.bf16.mxu0 0
        %937 = vmatpush1.bf16.msra.mxu0 0
        %938 = vmatprep.subr.bf16.mxu0 0
        %939 = vmatpush1.bf16.msra.mxu0 0
        %940 = vmatprep.subr.bf16.mxu0 0
        %941 = vmatpush1.bf16.msra.mxu0 0
        %942 = vmatprep.subr.bf16.mxu0 0
        %943 = vmatpush1.bf16.msra.mxu0 %v926
        %944 = vmatprep.subr.bf16.mxu0 0
        %945 = vmatpush1.bf16.msra.mxu0 %v925
        %946 = vmatprep.subr.bf16.mxu0 0
        %947 = vmatpush1.bf16.msra.mxu0 %v924
        %948 = vmatprep.subr.bf16.mxu0 0
        %949 = vmatpush1.bf16.msra.mxu0 %v923
        %950 = vmatprep.subr.bf16.mxu0 0
        %951 = vmatpush2.bf16.msra.mxu0 0
        %952 = vmatprep.subr.bf16.mxu0 0
        %953 = vmatpush2.bf16.msra.mxu0 0
        %954 = vmatprep.subr.bf16.mxu0 0
        %955 = vmatpush2.bf16.msra.mxu0 0
        %956 = vmatprep.subr.bf16.mxu0 0
        %957 = vmatpush2.bf16.msra.mxu0 0
        %958 = vmatprep.subr.bf16.mxu0 0
        %959 = vmatpush2.bf16.msra.mxu0 0
        %960 = vmatprep.subr.bf16.mxu0 0
        %961 = vmatpush2.bf16.msra.mxu0 0
        %962 = vmatprep.subr.bf16.mxu0 0
        %963 = vmatpush2.bf16.msra.mxu0 0
        %964 = vmatprep.subr.bf16.mxu0 0
        %965 = vmatpush2.bf16.msra.mxu0 0
        %966 = vmatprep.mubr.bf16.mxu0 0
        %967 = vmatmul.mubr.bf16.gmra.mxu0 %v932
        %v968 = vpop.f32.mrf.mxu0
        %v969 = vadd.f32 0.0, %v968
        %v970 = vpop.f32.mrf.mxu0
        %v971 = vpop.f32.mrf.mxu0
        %v972 = vpop.f32.mrf.mxu0
        %973 = vdwg.mxu0
        %v974 = vadd.f32 %v897, %v969
        %v975 = vstv %s228
        %v976 = vadd.f32 %v974, %v975
        %v977 = vmax.f32 %v976, 0.0
        %v978 = vstv %s229
        %v979 = vadd.f32 %v974, %v978
        %v980 = vmax.f32 %v979, 0.0
        %v981 = vstv %s230
        %v982 = vmul.f32 %v981, %v977
        %v983 = vstv %s231
        %v984 = vmul.f32 %v983, %v980
        %v986 = vrot.slane %v984, 1
        %v988 = vadd.f32 %v982, %v986
        %v989 = vstv %s232
        %v990 = vadd.f32 %v988, %v989
        %991 = vst [vmem:[%s134] sm:$0x1] %v990
        %p992 = scmp.lt.s32.totalorder %s15, 5
        %s993 = scalar_select %p992, %s15, 5
        %s994 = scalar_lea.vmem %s3, %s993
        // Predicated region
        $region67: #{out_conv_pallas.1} parent=27 // pred_check
          %p995 = pneg %p75
        $region68: #{out_conv_pallas.1} parent=27 // pred_check_branch
          %997 = sbr.rel (%p995) target = $region70
        $region69: #{out_conv_pallas.1} parent=27 // pred_region
          _
        $region70: #{out_conv_pallas.1} parent=27 // pred_fallthru
          _
      $region28: #{out_conv_pallas.1} parent=5 // pred_fallthru
        _
      %p998 = scmp.le.s32.totalorder 2, %s10
      // Predicated region
      $region71: #{out_conv_pallas.1} parent=5 // pred_check
        %p999 = pneg %p998
      $region72: #{out_conv_pallas.1} parent=5 // pred_check_branch
        %1001 = sbr.rel (%p999) target = $region74
      $region73: #{out_conv_pallas.1} parent=5 // pred_region
        %s1002 = ssub.s32 %s10, 2
        // Predicated region
        $region75: #{out_conv_pallas.1} parent=73 // pred_check
          %p1003 = pneg %p81
        $region76: #{out_conv_pallas.1} parent=73 // pred_check_branch
          %1005 = sbr.rel (%p1003) target = $region78
        $region77: #{out_conv_pallas.1} parent=73 // pred_region
          %p1006 = scmp.lt.s32.totalorder %s16, 5
          %s1007 = scalar_select %p1006, %s16, 5
          %s1008 = scalar_lea.vmem %s3, %s1007
        $region78: #{out_conv_pallas.1} parent=73 // pred_fallthru
          _
      $region74: #{out_conv_pallas.1} parent=5 // pred_fallthru
        _
    $region6: #{out_conv_pallas.1} parent=1 // loop_footer
      %s14 = sadd.s32 1, %s10
    $region7: #{out_conv_pallas.1} parent=1 // loop_footer_branch
      %9 = sbr.rel target = $region3
    $region8: #{out_conv_pallas.1} parent=1 // loop_exit
      _
    %1009 = vsyncpa [#allocation5], 1
    %s1010 = scalar_lea.sflag [#allocation5], 1
    %1011 = vsyncpa %s1010, 1
  %1012 = vsyncmov [#allocation3]
  %s1013 = vpop.sfrf %1012
  %p1014 = scmp.eq.s32.totalorder %s1013, 0
  %p1015 = pneg %p1014
  %1017 = shalt.err (%p1015)
  %s1018 = scalar_lea.sflag [#allocation3], 1
  %1019 = vsyncmov %s1018
  %s1020 = vpop.sfrf %1019
  %p1021 = scmp.eq.s32.totalorder %s1020, 0
  %p1022 = pneg %p1021
  %1024 = shalt.err (%p1022)

</llo_original>
